<compile_context>
chip_gen: v7x
topology: tpu7x:2x2x1
jax: 0.10.0
libtpu: 0.0.40
codegen_flags: <defaults>
</compile_context>

<pallas_src>
import functools

import jax
import jax.numpy as jnp
from jax.experimental import pallas as pl
from jax.experimental.pallas import tpu as pltpu


def _round_up(x: int, m: int) -> int:
    return (x + m - 1) // m * m


# ----------------------------------------------------------------------------
# Fused Pallas kernel: one M-tile through ALL layers.
#   refs = (w0, b0, w1, b1, ..., w_{L-1}, b_{L-1}, o_ref)
#   x_ref : (TM, Kp)   w_i : (Kp_i, Np_i)   b_i : (1, Np_i)   o_ref : (TM, Op)
# ----------------------------------------------------------------------------
def _mlp_kernel(x_ref, *refs, num_layers: int):
    o_ref = refs[-1]
    h = x_ref[...]
    for i in range(num_layers):
        w_ref = refs[2 * i]
        b_ref = refs[2 * i + 1]
        h = jnp.dot(h, w_ref[...], preferred_element_type=jnp.float32)
        h = h + b_ref[...]                      # broadcast bias over rows
        if i < num_layers - 1:
            h = jnp.maximum(h, 0.0)
    o_ref[...] = h.astype(o_ref.dtype)


# ----------------------------------------------------------------------------
# Fused forward: pad rows, tile M with a parallel grid, run one pallas_call.
# wts[i] is the pre-transposed, 128-padded (Kp_i, Np_i) weight; bs[i] is (1, Np_i).
# ----------------------------------------------------------------------------
def _fused_mlp_forward(x, wts, bs, *, out_dim: int, tm_max: int = 512):
    lead = x.shape[:-1]
    x2d = x.reshape(-1, x.shape[-1])
    M, K = x2d.shape
    Kp = wts[0].shape[0]
    Op = wts[-1].shape[1]
    num_layers = len(wts)

    # Row tiling: TM-row tiles (multiple of 8 sublanes), M padded to a multiple of TM.
    Mp = _round_up(max(M, 1), 8)
    TM = min(tm_max, Mp)
    Mp = _round_up(Mp, TM)

    # Pad rows (to Mp) and input features (to Kp, lane-dense). Zero padding is
    # exact: zero input cols hit zero weight rows; padded rows are sliced off.
    xp = jnp.pad(x2d, ((0, Mp - M), (0, Kp - K)))

    in_specs = [pl.BlockSpec((TM, Kp), lambda i: (i, 0))]
    flat_params = []
    for w, b in zip(wts, bs):
        # Full-array blocks with constant index_map -> weights stay VMEM-resident.
        in_specs.append(pl.BlockSpec(w.shape, lambda i: (0, 0)))
        in_specs.append(pl.BlockSpec(b.shape, lambda i: (0, 0)))
        flat_params += [w, b]
    out_spec = pl.BlockSpec((TM, Op), lambda i: (i, 0))

    # Advisory cost estimate (padded problem).
    flops = 2 * Mp * sum(int(w.shape[0]) * int(w.shape[1]) for w in wts)
    param_bytes = sum(int(w.size) * w.dtype.itemsize for w in wts) + sum(
        int(b.size) * b.dtype.itemsize for b in bs
    )
    bytes_accessed = int(xp.size) * xp.dtype.itemsize + param_bytes + Mp * Op * 4
    cost = pl.CostEstimate(
        flops=flops, transcendentals=0, bytes_accessed=bytes_accessed
    )

    # VMEM budget: resident weights + double-buffered x/out tiles + live activations.
    tile_bytes = (TM * Kp + TM * Op) * 4
    act_bytes = TM * max(int(w.shape[1]) for w in wts) * 4 * num_layers
    vmem_limit = int(
        min(64 << 20, max(8 << 20, 2 * (param_bytes + 2 * tile_bytes + act_bytes)))
    )

    out = pl.pallas_call(
        functools.partial(_mlp_kernel, num_layers=num_layers),
        out_shape=jax.ShapeDtypeStruct((Mp, Op), x.dtype),
        grid=(Mp // TM,),
        in_specs=in_specs,
        out_specs=out_spec,
        compiler_params=pltpu.CompilerParams(
            dimension_semantics=("parallel",),   # M tiles independent -> megacore on v7x
            vmem_limit_bytes=vmem_limit,
        ),
        cost_estimate=cost,
    )(xp, *flat_params)

    return out[:M, :out_dim].reshape(*lead, out_dim)


# ----------------------------------------------------------------------------
# MLP wrapper (mirrors the PyTorch module's __init__ / forward)
# ----------------------------------------------------------------------------
class MLP:
    def __init__(self, input_dim, hidden_dim, output_dim, num_layers, key):
        self.num_layers = num_layers
        self.output_dim = output_dim
        h = [hidden_dim] * (num_layers - 1)
        dims = list(zip([input_dim] + h, h + [output_dim]))

        self.params = []      # torch-layout (out, in) weights + (out,) biases (for reference)
        self._wts = []        # kernel-layout: (Kp, Np) pre-transposed, 128-padded
        self._bs = []         # kernel-layout: (1, Np)
        for n_in, n_out in dims:
            key, kw, kb = jax.random.split(key, 3)
            # Deterministic init (Kaiming-uniform-ish, like nn.Linear default bound)
            bound = 1.0 / jnp.sqrt(jnp.float32(n_in))
            w = jax.random.uniform(kw, (n_out, n_in), jnp.float32, -bound, bound)
            b = jax.random.uniform(kb, (n_out,), jnp.float32, -bound, bound)
            self.params.append((w, b))

            kp = _round_up(n_in, 128)
            npad = _round_up(n_out, 128)
            wt = jnp.zeros((kp, npad), jnp.float32).at[:n_in, :n_out].set(w.T)
            bp = jnp.zeros((1, npad), jnp.float32).at[:, :n_out].set(b)
            self._wts.append(wt)
            self._bs.append(bp)

        self._wts = tuple(self._wts)
        self._bs = tuple(self._bs)
        self._forward = jax.jit(
            functools.partial(_fused_mlp_forward, out_dim=output_dim)
        )

    def __call__(self, x):
        # x: (..., input_dim)
        return self._forward(x, self._wts, self._bs)


# ----------------------------------------------------------------------------
def _reference_mlp(params, x):
    lead = x.shape[:-1]
    y = x.reshape(-1, x.shape[-1])
    n = len(params)
    for i, (w, b) in enumerate(params):
        y = y @ w.T + b
        if i < n - 1:
            y = jnp.maximum(y, 0.0)
    return y.reshape(*lead, y.shape[-1])


if __name__ == "__main__":
    key = jax.random.PRNGKey(0)
    k_in, k_in2, k_mlp = jax.random.split(key, 3)

    # Small shapes consistent with the module: queries of shape (batch, seq, dim)
    batch, seq = 2, 8
    input_dim, hidden_dim, output_dim, num_layers = 32, 32, 4, 3

    mlp = MLP(input_dim, hidden_dim, output_dim, num_layers, k_mlp)

    # Case 1: tiny (single-tile grid).
    x = jax.random.normal(k_in, (batch, seq, input_dim), jnp.float32)
    y = jax.block_until_ready(mlp(x))
    y_ref = _reference_mlp(mlp.params, x)
    assert y.shape == (batch, seq, output_dim)
    assert jnp.allclose(y, y_ref, atol=1e-4, rtol=1e-5)

    # Case 2: enough rows to exercise multi-tile grid + row padding.
    x2 = jax.random.normal(k_in2, (2, 260, input_dim), jnp.float32)
    y2 = jax.block_until_ready(mlp(x2))
    y2_ref = _reference_mlp(mlp.params, x2)
    assert y2.shape == (2, 260, output_dim)
    assert jnp.allclose(y2, y2_ref, atol=1e-4, rtol=1e-5)

    print("KERNEL_OK")
</pallas_src>

<mosaic_0001>
module attributes {stable_mosaic.version = 11 : i64} {
  func.func @_mlp_kernel(%arg0: i32, %arg1: memref<16x128xf32, #tpu.memory_space<vmem>>, %arg2: memref<128x128xf32, #tpu.memory_space<vmem>>, %arg3: memref<1x128xf32, #tpu.memory_space<vmem>>, %arg4: memref<128x128xf32, #tpu.memory_space<vmem>>, %arg5: memref<1x128xf32, #tpu.memory_space<vmem>>, %arg6: memref<128x128xf32, #tpu.memory_space<vmem>>, %arg7: memref<1x128xf32, #tpu.memory_space<vmem>>, %arg8: memref<16x128xf32, #tpu.memory_space<vmem>>) attributes {dimension_semantics = [#tpu.dimension_semantics<parallel>], iteration_bounds = array<i64: 1>, scalar_prefetch = 0 : i64, scratch_operands = 0 : i64, tpu.core_type = #tpu.core_type<tc>, window_params = [{transform_indices = @transform_0, window_bounds = array<i64: 16, 128>}, {pipeline_mode = #tpu.pipeline_mode<synchronous>, transform_indices = @transform_1, window_bounds = array<i64: 128, 128>}, {pipeline_mode = #tpu.pipeline_mode<synchronous>, transform_indices = @transform_2, window_bounds = array<i64: 1, 128>}, {pipeline_mode = #tpu.pipeline_mode<synchronous>, transform_indices = @transform_3, window_bounds = array<i64: 128, 128>}, {pipeline_mode = #tpu.pipeline_mode<synchronous>, transform_indices = @transform_4, window_bounds = array<i64: 1, 128>}, {pipeline_mode = #tpu.pipeline_mode<synchronous>, transform_indices = @transform_5, window_bounds = array<i64: 128, 128>}, {pipeline_mode = #tpu.pipeline_mode<synchronous>, transform_indices = @transform_6, window_bounds = array<i64: 1, 128>}, {transform_indices = @transform_7, window_bounds = array<i64: 16, 128>}]} {
    %c0 = arith.constant 0 : index
    %c0_0 = arith.constant 0 : index
    %0 = vector.load %arg1[%c0, %c0_0] : memref<16x128xf32, #tpu.memory_space<vmem>>, vector<16x128xf32>
    %c0_1 = arith.constant 0 : index
    %c0_2 = arith.constant 0 : index
    %1 = vector.load %arg2[%c0_1, %c0_2] : memref<128x128xf32, #tpu.memory_space<vmem>>, vector<128x128xf32>
    %cst = arith.constant dense<0.000000e+00> : vector<16x128xf32>
    %2 = tpu.matmul %0, %1, %cst {dimension_numbers = #tpu.dot_dimension_numbers<[1], [0], [0], [1], [0, 0, 1, 1], [], []>} : vector<16x128xf32>, vector<128x128xf32>, vector<16x128xf32> -> vector<16x128xf32>
    %c0_3 = arith.constant 0 : index
    %c0_4 = arith.constant 0 : index
    %3 = vector.load %arg3[%c0_3, %c0_4] : memref<1x128xf32, #tpu.memory_space<vmem>>, vector<1x128xf32>
    %4 = vector.broadcast %3 : vector<1x128xf32> to vector<16x128xf32>
    %5 = arith.addf %2, %4 : vector<16x128xf32>
    %cst_5 = arith.constant 0.000000e+00 : f32
    %6 = vector.broadcast %cst_5 : f32 to vector<16x128xf32>
    %7 = arith.maximumf %5, %6 : vector<16x128xf32>
    %c0_6 = arith.constant 0 : index
    %c0_7 = arith.constant 0 : index
    %8 = vector.load %arg4[%c0_6, %c0_7] : memref<128x128xf32, #tpu.memory_space<vmem>>, vector<128x128xf32>
    %cst_8 = arith.constant dense<0.000000e+00> : vector<16x128xf32>
    %9 = tpu.matmul %7, %8, %cst_8 {dimension_numbers = #tpu.dot_dimension_numbers<[1], [0], [0], [1], [0, 0, 1, 1], [], []>} : vector<16x128xf32>, vector<128x128xf32>, vector<16x128xf32> -> vector<16x128xf32>
    %c0_9 = arith.constant 0 : index
    %c0_10 = arith.constant 0 : index
    %10 = vector.load %arg5[%c0_9, %c0_10] : memref<1x128xf32, #tpu.memory_space<vmem>>, vector<1x128xf32>
    %11 = vector.broadcast %10 : vector<1x128xf32> to vector<16x128xf32>
    %12 = arith.addf %9, %11 : vector<16x128xf32>
    %cst_11 = arith.constant 0.000000e+00 : f32
    %13 = vector.broadcast %cst_11 : f32 to vector<16x128xf32>
    %14 = arith.maximumf %12, %13 : vector<16x128xf32>
    %c0_12 = arith.constant 0 : index
    %c0_13 = arith.constant 0 : index
    %15 = vector.load %arg6[%c0_12, %c0_13] : memref<128x128xf32, #tpu.memory_space<vmem>>, vector<128x128xf32>
    %cst_14 = arith.constant dense<0.000000e+00> : vector<16x128xf32>
    %16 = tpu.matmul %14, %15, %cst_14 {dimension_numbers = #tpu.dot_dimension_numbers<[1], [0], [0], [1], [0, 0, 1, 1], [], []>} : vector<16x128xf32>, vector<128x128xf32>, vector<16x128xf32> -> vector<16x128xf32>
    %c0_15 = arith.constant 0 : index
    %c0_16 = arith.constant 0 : index
    %17 = vector.load %arg7[%c0_15, %c0_16] : memref<1x128xf32, #tpu.memory_space<vmem>>, vector<1x128xf32>
    %18 = vector.broadcast %17 : vector<1x128xf32> to vector<16x128xf32>
    %19 = arith.addf %16, %18 : vector<16x128xf32>
    %c0_17 = arith.constant 0 : index
    %c0_18 = arith.constant 0 : index
    %20 = vector.load %arg8[%c0_17, %c0_18] : memref<16x128xf32, #tpu.memory_space<vmem>>, vector<16x128xf32>
    tpu.vector_store %arg8[%c0_17, %c0_18], %19 {strides = array<i32>} : memref<16x128xf32, #tpu.memory_space<vmem>>, vector<16x128xf32>,
    return
  }
  func.func @transform_0(%arg0: i32) -> (i32, i32) {
    %c0_i32 = arith.constant 0 : i32
    %c0_i32_0 = arith.constant 0 : i32
    return %arg0, %c0_i32 : i32, i32
  }
  func.func @transform_1(%arg0: i32) -> (i32, i32) {
    %c0_i32 = arith.constant 0 : i32
    %c0_i32_0 = arith.constant 0 : i32
    %c0_i32_1 = arith.constant 0 : i32
    return %c0_i32, %c0_i32_0 : i32, i32
  }
  func.func @transform_2(%arg0: i32) -> (i32, i32) {
    %c0_i32 = arith.constant 0 : i32
    %c0_i32_0 = arith.constant 0 : i32
    %c0_i32_1 = arith.constant 0 : i32
    return %c0_i32, %c0_i32_0 : i32, i32
  }
  func.func @transform_3(%arg0: i32) -> (i32, i32) {
    %c0_i32 = arith.constant 0 : i32
    %c0_i32_0 = arith.constant 0 : i32
    %c0_i32_1 = arith.constant 0 : i32
    return %c0_i32, %c0_i32_0 : i32, i32
  }
  func.func @transform_4(%arg0: i32) -> (i32, i32) {
    %c0_i32 = arith.constant 0 : i32
    %c0_i32_0 = arith.constant 0 : i32
    %c0_i32_1 = arith.constant 0 : i32
    return %c0_i32, %c0_i32_0 : i32, i32
  }
  func.func @transform_5(%arg0: i32) -> (i32, i32) {
    %c0_i32 = arith.constant 0 : i32
    %c0_i32_0 = arith.constant 0 : i32
    %c0_i32_1 = arith.constant 0 : i32
    return %c0_i32, %c0_i32_0 : i32, i32
  }
  func.func @transform_6(%arg0: i32) -> (i32, i32) {
    %c0_i32 = arith.constant 0 : i32
    %c0_i32_0 = arith.constant 0 : i32
    %c0_i32_1 = arith.constant 0 : i32
    return %c0_i32, %c0_i32_0 : i32, i32
  }
  func.func @transform_7(%arg0: i32) -> (i32, i32) {
    %c0_i32 = arith.constant 0 : i32
    %c0_i32_0 = arith.constant 0 : i32
    return %arg0, %c0_i32 : i32, i32
  }
}

</mosaic_0001>

<llo_original>
// kernel: _fused_mlp_forward.1
$region0: #{_fused_mlp_forward.1}
  #allocation0 [shape = 'u32[]', space=smem, size = 0x4, offset = 0x4, fixed_abs, tag = 'smem constant byte address 0x4 - core index']
  #allocation1 [shape = 'u32[144,128]{1,0:T(1,128)}', space=vmem, size = 0x12000, scoped, tag = 'internal scratch']
  %s0 = inlined_call_operand.vmem [shape: f32[16,128], index: 0, kind: input, shape index: {}]
  %s1 = inlined_call_operand.hbm [shape: f32[128,128], index: 1, kind: input, shape index: {}]
  %s2 = inlined_call_operand.vmem [shape: f32[1,128], index: 2, kind: input, shape index: {}]
  %s3 = inlined_call_operand.hbm [shape: f32[128,128], index: 3, kind: input, shape index: {}]
  %s4 = inlined_call_operand.vmem [shape: f32[1,128], index: 4, kind: input, shape index: {}]
  %s5 = inlined_call_operand.hbm [shape: f32[128,128], index: 5, kind: input, shape index: {}]
  %s6 = inlined_call_operand.vmem [shape: f32[1,128], index: 6, kind: input, shape index: {}]
  %s7 = inlined_call_operand.vmem [shape: f32[16,128], index: 7, kind: output, shape index: {}]
  %s8 = sld [smem:[#allocation0]]
  $region50: #{_fused_mlp_forward.1} parent=0
    _
  %s10 = ssub.s32 1, %s8
  %s11 = scalar_select 0, %s10, %s8
  $region1: #{_fused_mlp_forward.1} parent=0
    #allocation2 [shape = 'u8[65536]{0}', space=vmem, size = 0x10000, scoped, tag = 'input window, operand 1, single buffered']
    #allocation3 [shape = 's32[1]{0}', space=sflag, size = 0x4, scoped, tag = 'scoped memory for _fused_mlp_forward.1']
    #allocation4 [shape = 'u8[65536]{0}', space=vmem, size = 0x10000, scoped, tag = 'input window, operand 3, single buffered']
    #allocation5 [shape = 's32[1]{0}', space=sflag, size = 0x4, scoped, tag = 'scoped memory for _fused_mlp_forward.1']
    #allocation6 [shape = 'u8[65536]{0}', space=vmem, size = 0x10000, scoped, tag = 'input window, operand 5, single buffered']
    %12 = vsyncpa [#allocation3], 0
    %13 = vsyncpa [#allocation5], 0
    // Predicated region
    $region2: #{_fused_mlp_forward.1} parent=1 // pred_check
      _
    $region3: #{_fused_mlp_forward.1} parent=1 // pred_check_branch
      %15 = sbr.rel (0) target = $region5
    $region4: #{_fused_mlp_forward.1} parent=1 // pred_region
      _
    $region5: #{_fused_mlp_forward.1} parent=1 // pred_fallthru
      _
    // Predicated region
    $region6: #{_fused_mlp_forward.1} parent=1 // pred_check
      _
    $region7: #{_fused_mlp_forward.1} parent=1 // pred_check_branch
      %17 = sbr.rel (0) target = $region9
    $region8: #{_fused_mlp_forward.1} parent=1 // pred_region
      %s19 = ssub.s32 2048, 2048
      %20 = vsyncadd [#allocation3], %s19
      %s21 = sshll.u32 [#allocation2], 4
      %s22 = int_to_ptr.vmem [resolvable:$true] %s21
      %27 = dma.hbm_to_vmem [thread:$0]  %s1, 2048, %s22, [#allocation3], 128, 128, 8
    $region9: #{_fused_mlp_forward.1} parent=1 // pred_fallthru
      _
    // Predicated region
    $region10: #{_fused_mlp_forward.1} parent=1 // pred_check
      _
    $region11: #{_fused_mlp_forward.1} parent=1 // pred_check_branch
      %29 = sbr.rel (0) target = $region13
    $region12: #{_fused_mlp_forward.1} parent=1 // pred_region
      _
    $region13: #{_fused_mlp_forward.1} parent=1 // pred_fallthru
      _
    // Predicated region
    $region14: #{_fused_mlp_forward.1} parent=1 // pred_check
      _
    $region15: #{_fused_mlp_forward.1} parent=1 // pred_check_branch
      %31 = sbr.rel (0) target = $region17
    $region16: #{_fused_mlp_forward.1} parent=1 // pred_region
      %s33 = ssub.s32 2048, 2048
      %34 = vsyncadd [#allocation5], %s33
      %s35 = sshll.u32 [#allocation4], 4
      %s36 = int_to_ptr.vmem [resolvable:$true] %s35
      %41 = dma.hbm_to_vmem [thread:$0]  %s3, 2048, %s36, [#allocation5], 128, 128, 8
    $region17: #{_fused_mlp_forward.1} parent=1 // pred_fallthru
      _
    // Predicated region
    $region18: #{_fused_mlp_forward.1} parent=1 // pred_check
      _
    $region19: #{_fused_mlp_forward.1} parent=1 // pred_check_branch
      %43 = sbr.rel (0) target = $region21
    $region20: #{_fused_mlp_forward.1} parent=1 // pred_region
      _
    $region21: #{_fused_mlp_forward.1} parent=1 // pred_fallthru
      _
    // Predicated region
    $region22: #{_fused_mlp_forward.1} parent=1 // pred_check
      _
    $region23: #{_fused_mlp_forward.1} parent=1 // pred_check_branch
      %45 = sbr.rel (0) target = $region25
    $region24: #{_fused_mlp_forward.1} parent=1 // pred_region
      %s47 = ssub.s32 2048, 2048
      %48 = vsyncadd [#allocation5], %s47
      %s49 = sshll.u32 [#allocation6], 4
      %s50 = int_to_ptr.vmem [resolvable:$true] %s49
      %55 = dma.hbm_to_vmem [thread:$0]  %s5, 2048, %s50, [#allocation5], 128, 128, 8
    $region25: #{_fused_mlp_forward.1} parent=1 // pred_fallthru
      _
    // Predicated region
    $region26: #{_fused_mlp_forward.1} parent=1 // pred_check
      _
    $region27: #{_fused_mlp_forward.1} parent=1 // pred_check_branch
      %57 = sbr.rel (0) target = $region29
    $region28: #{_fused_mlp_forward.1} parent=1 // pred_region
      _
    $region29: #{_fused_mlp_forward.1} parent=1 // pred_fallthru
      _
    // Predicated region
    $region30: #{_fused_mlp_forward.1} parent=1 // pred_check
      _
    $region31: #{_fused_mlp_forward.1} parent=1 // pred_check_branch
      %59 = sbr.rel (0) target = $region33
    $region32: #{_fused_mlp_forward.1} parent=1 // pred_region
      %60 = dma.done [#allocation3], 2048
    $region33: #{_fused_mlp_forward.1} parent=1 // pred_fallthru
      _
    // Predicated region
    $region34: #{_fused_mlp_forward.1} parent=1 // pred_check
      _
    $region35: #{_fused_mlp_forward.1} parent=1 // pred_check_branch
      %62 = sbr.rel (0) target = $region37
    $region36: #{_fused_mlp_forward.1} parent=1 // pred_region
      %63 = dma.done [#allocation5], 2048
    $region37: #{_fused_mlp_forward.1} parent=1 // pred_fallthru
      _
    // Predicated region
    $region38: #{_fused_mlp_forward.1} parent=1 // pred_check
      _
    $region39: #{_fused_mlp_forward.1} parent=1 // pred_check_branch
      %65 = sbr.rel (0) target = $region41
    $region40: #{_fused_mlp_forward.1} parent=1 // pred_region
      %66 = dma.done [#allocation5], 2048
    $region41: #{_fused_mlp_forward.1} parent=1 // pred_fallthru
      _
    %v67 = vld [vmem:[%s0] sm:$0xff]
    %v68 = vld [vmem:[%s0 + $0x8] sm:$0xff]
    %v69 = vld [vmem:[#allocation2] sm:$0xff]
    %v70 = vld [vmem:[#allocation2 + $0x8] sm:$0xff]
    %v71 = vld [vmem:[#allocation2 + $0x10] sm:$0xff]
    %v72 = vld [vmem:[#allocation2 + $0x18] sm:$0xff]
    %v73 = vld [vmem:[#allocation2 + $0x20] sm:$0xff]
    %v74 = vld [vmem:[#allocation2 + $0x28] sm:$0xff]
    %v75 = vld [vmem:[#allocation2 + $0x30] sm:$0xff]
    %v76 = vld [vmem:[#allocation2 + $0x38] sm:$0xff]
    %v77 = vld [vmem:[#allocation2 + $0x40] sm:$0xff]
    %v78 = vld [vmem:[#allocation2 + $0x48] sm:$0xff]
    %v79 = vld [vmem:[#allocation2 + $0x50] sm:$0xff]
    %v80 = vld [vmem:[#allocation2 + $0x58] sm:$0xff]
    %v81 = vld [vmem:[#allocation2 + $0x60] sm:$0xff]
    %v82 = vld [vmem:[#allocation2 + $0x68] sm:$0xff]
    %v83 = vld [vmem:[#allocation2 + $0x70] sm:$0xff]
    %v84 = vld [vmem:[#allocation2 + $0x78] sm:$0xff]
    %v85 = vld [vmem:[%s2] sm:$0x1]
    %v87 = vlaneseq
    %v88 = vshrl.u32 %v87, 7
    %v89 = vsub.s32 0, %v88
    %v90 = vrot.slane %v85, %v89
    %92 = vmatprep.subr.mxu0 0.0
    %93 = vmatpush1.msra.mxu0 %v69
    %94 = vmatprep.subr.mxu0 0.0
    %95 = vmatpush1.msra.mxu0 %v70
    %96 = vmatprep.subr.mxu0 0.0
    %97 = vmatpush1.msra.mxu0 %v71
    %98 = vmatprep.subr.mxu0 0.0
    %99 = vmatpush1.msra.mxu0 %v72
    %100 = vmatprep.subr.mxu0 0.0
    %101 = vmatpush1.msra.mxu0 %v73
    %102 = vmatprep.subr.mxu0 0.0
    %103 = vmatpush1.msra.mxu0 %v74
    %104 = vmatprep.subr.mxu0 0.0
    %105 = vmatpush1.msra.mxu0 %v75
    %106 = vmatprep.subr.mxu0 0.0
    %107 = vmatpush1.msra.mxu0 %v76
    %108 = vmatprep.subr.mxu0 0.0
    %109 = vmatpush1.msra.mxu0 %v77
    %110 = vmatprep.subr.mxu0 0.0
    %111 = vmatpush1.msra.mxu0 %v78
    %112 = vmatprep.subr.mxu0 0.0
    %113 = vmatpush1.msra.mxu0 %v79
    %114 = vmatprep.subr.mxu0 0.0
    %115 = vmatpush1.msra.mxu0 %v80
    %116 = vmatprep.subr.mxu0 0.0
    %117 = vmatpush1.msra.mxu0 %v81
    %118 = vmatprep.subr.mxu0 0.0
    %119 = vmatpush1.msra.mxu0 %v82
    %120 = vmatprep.subr.mxu0 0.0
    %121 = vmatpush1.msra.mxu0 %v83
    %122 = vmatprep.subr.mxu0 0.0
    %123 = vmatpush1.msra.mxu0 %v84
    %124 = vmatprep.subr.mxu0 0.0
    %125 = vmatpush1.msra.mxu0 0.0
    %126 = vmatprep.subr.mxu0 0.0
    %127 = vmatpush1.msra.mxu0 0.0
    %128 = vmatprep.subr.mxu0 0.0
    %129 = vmatpush1.msra.mxu0 0.0
    %130 = vmatprep.subr.mxu0 0.0
    %131 = vmatpush1.msra.mxu0 0.0
    %132 = vmatprep.subr.mxu0 0.0
    %133 = vmatpush1.msra.mxu0 0.0
    %134 = vmatprep.subr.mxu0 0.0
    %135 = vmatpush1.msra.mxu0 0.0
    %136 = vmatprep.subr.mxu0 0.0
    %137 = vmatpush1.msra.mxu0 0.0
    %138 = vmatprep.subr.mxu0 0.0
    %139 = vmatpush1.msra.mxu0 0.0
    %140 = vmatprep.subr.mxu0 0.0
    %141 = vmatpush1.msra.mxu0 0.0
    %142 = vmatprep.subr.mxu0 0.0
    %143 = vmatpush1.msra.mxu0 0.0
    %144 = vmatprep.subr.mxu0 0.0
    %145 = vmatpush1.msra.mxu0 0.0
    %146 = vmatprep.subr.mxu0 0.0
    %147 = vmatpush1.msra.mxu0 0.0
    %148 = vmatprep.subr.mxu0 0.0
    %149 = vmatpush1.msra.mxu0 0.0
    %150 = vmatprep.subr.mxu0 0.0
    %151 = vmatpush1.msra.mxu0 0.0
    %152 = vmatprep.subr.mxu0 0.0
    %153 = vmatpush1.msra.mxu0 0.0
    %154 = vmatprep.subr.mxu0 0.0
    %155 = vmatpush1.msra.mxu0 0.0
    %156 = vmatprep.mubr.f32.mxu0 0.0
    %157 = vmatmul.mubr.f32.gmra.mrb[0].mxu0 %v67
    %v158 = vpop.f32.mrb[0].mxu0
    %v159 = vadd.f32 %v90, %v158
    %v160 = vpop.f32.mrb[0].mxu0
    %161 = vmatprep.mubr.f32.mxu0 0.0
    %162 = vmatmul.mubr.f32.gmra.mrb[0].mxu0 %v68
    %v163 = vpop.f32.mrb[0].mxu0
    %v164 = vadd.f32 %v90, %v163
    %v165 = vpop.f32.mrb[0].mxu0
    %166 = vdwg.mxu0
    %v167 = vmax.f32 %v159, 0.0
    %v168 = vmax.f32 %v164, 0.0
    %v169 = vld [vmem:[#allocation4] sm:$0xff]
    %v170 = vld [vmem:[#allocation4 + $0x8] sm:$0xff]
    %v171 = vld [vmem:[#allocation4 + $0x10] sm:$0xff]
    %v172 = vld [vmem:[#allocation4 + $0x18] sm:$0xff]
    %v173 = vld [vmem:[#allocation4 + $0x20] sm:$0xff]
    %v174 = vld [vmem:[#allocation4 + $0x28] sm:$0xff]
    %v175 = vld [vmem:[#allocation4 + $0x30] sm:$0xff]
    %v176 = vld [vmem:[#allocation4 + $0x38] sm:$0xff]
    %v177 = vld [vmem:[#allocation4 + $0x40] sm:$0xff]
    %v178 = vld [vmem:[#allocation4 + $0x48] sm:$0xff]
    %v179 = vld [vmem:[#allocation4 + $0x50] sm:$0xff]
    %v180 = vld [vmem:[#allocation4 + $0x58] sm:$0xff]
    %v181 = vld [vmem:[#allocation4 + $0x60] sm:$0xff]
    %v182 = vld [vmem:[#allocation4 + $0x68] sm:$0xff]
    %v183 = vld [vmem:[#allocation4 + $0x70] sm:$0xff]
    %v184 = vld [vmem:[#allocation4 + $0x78] sm:$0xff]
    %v185 = vld [vmem:[%s4] sm:$0x1]
    %v187 = vlaneseq
    %v188 = vshrl.u32 %v187, 7
    %v189 = vsub.s32 0, %v188
    %v190 = vrot.slane %v185, %v189
    %192 = vmatprep.subr.mxu0 0.0
    %193 = vmatpush1.msra.mxu0 %v169
    %194 = vmatprep.subr.mxu0 0.0
    %195 = vmatpush1.msra.mxu0 %v170
    %196 = vmatprep.subr.mxu0 0.0
    %197 = vmatpush1.msra.mxu0 %v171
    %198 = vmatprep.subr.mxu0 0.0
    %199 = vmatpush1.msra.mxu0 %v172
    %200 = vmatprep.subr.mxu0 0.0
    %201 = vmatpush1.msra.mxu0 %v173
    %202 = vmatprep.subr.mxu0 0.0
    %203 = vmatpush1.msra.mxu0 %v174
    %204 = vmatprep.subr.mxu0 0.0
    %205 = vmatpush1.msra.mxu0 %v175
    %206 = vmatprep.subr.mxu0 0.0
    %207 = vmatpush1.msra.mxu0 %v176
    %208 = vmatprep.subr.mxu0 0.0
    %209 = vmatpush1.msra.mxu0 %v177
    %210 = vmatprep.subr.mxu0 0.0
    %211 = vmatpush1.msra.mxu0 %v178
    %212 = vmatprep.subr.mxu0 0.0
    %213 = vmatpush1.msra.mxu0 %v179
    %214 = vmatprep.subr.mxu0 0.0
    %215 = vmatpush1.msra.mxu0 %v180
    %216 = vmatprep.subr.mxu0 0.0
    %217 = vmatpush1.msra.mxu0 %v181
    %218 = vmatprep.subr.mxu0 0.0
    %219 = vmatpush1.msra.mxu0 %v182
    %220 = vmatprep.subr.mxu0 0.0
    %221 = vmatpush1.msra.mxu0 %v183
    %222 = vmatprep.subr.mxu0 0.0
    %223 = vmatpush1.msra.mxu0 %v184
    %224 = vmatprep.subr.mxu0 0.0
    %225 = vmatpush1.msra.mxu0 0.0
    %226 = vmatprep.subr.mxu0 0.0
    %227 = vmatpush1.msra.mxu0 0.0
    %228 = vmatprep.subr.mxu0 0.0
    %229 = vmatpush1.msra.mxu0 0.0
    %230 = vmatprep.subr.mxu0 0.0
    %231 = vmatpush1.msra.mxu0 0.0
    %232 = vmatprep.subr.mxu0 0.0
    %233 = vmatpush1.msra.mxu0 0.0
    %234 = vmatprep.subr.mxu0 0.0
    %235 = vmatpush1.msra.mxu0 0.0
    %236 = vmatprep.subr.mxu0 0.0
    %237 = vmatpush1.msra.mxu0 0.0
    %238 = vmatprep.subr.mxu0 0.0
    %239 = vmatpush1.msra.mxu0 0.0
    %240 = vmatprep.subr.mxu0 0.0
    %241 = vmatpush1.msra.mxu0 0.0
    %242 = vmatprep.subr.mxu0 0.0
    %243 = vmatpush1.msra.mxu0 0.0
    %244 = vmatprep.subr.mxu0 0.0
    %245 = vmatpush1.msra.mxu0 0.0
    %246 = vmatprep.subr.mxu0 0.0
    %247 = vmatpush1.msra.mxu0 0.0
    %248 = vmatprep.subr.mxu0 0.0
    %249 = vmatpush1.msra.mxu0 0.0
    %250 = vmatprep.subr.mxu0 0.0
    %251 = vmatpush1.msra.mxu0 0.0
    %252 = vmatprep.subr.mxu0 0.0
    %253 = vmatpush1.msra.mxu0 0.0
    %254 = vmatprep.subr.mxu0 0.0
    %255 = vmatpush1.msra.mxu0 0.0
    %256 = vmatprep.mubr.f32.mxu0 0.0
    %257 = vmatmul.mubr.f32.gmra.mrb[0].mxu0 %v167
    %v258 = vpop.f32.mrb[0].mxu0
    %v259 = vadd.f32 %v190, %v258
    %v260 = vpop.f32.mrb[0].mxu0
    %261 = vmatprep.mubr.f32.mxu0 0.0
    %262 = vmatmul.mubr.f32.gmra.mrb[0].mxu0 %v168
    %v263 = vpop.f32.mrb[0].mxu0
    %v264 = vadd.f32 %v190, %v263
    %v265 = vpop.f32.mrb[0].mxu0
    %266 = vdwg.mxu0
    %v267 = vmax.f32 %v259, 0.0
    %v268 = vmax.f32 %v264, 0.0
    %v269 = vld [vmem:[#allocation6] sm:$0xff]
    %v270 = vld [vmem:[#allocation6 + $0x8] sm:$0xff]
    %v271 = vld [vmem:[#allocation6 + $0x10] sm:$0xff]
    %v272 = vld [vmem:[#allocation6 + $0x18] sm:$0xff]
    %v273 = vld [vmem:[#allocation6 + $0x20] sm:$0xff]
    %v274 = vld [vmem:[#allocation6 + $0x28] sm:$0xff]
    %v275 = vld [vmem:[#allocation6 + $0x30] sm:$0xff]
    %v276 = vld [vmem:[#allocation6 + $0x38] sm:$0xff]
    %v277 = vld [vmem:[#allocation6 + $0x40] sm:$0xff]
    %v278 = vld [vmem:[#allocation6 + $0x48] sm:$0xff]
    %v279 = vld [vmem:[#allocation6 + $0x50] sm:$0xff]
    %v280 = vld [vmem:[#allocation6 + $0x58] sm:$0xff]
    %v281 = vld [vmem:[#allocation6 + $0x60] sm:$0xff]
    %v282 = vld [vmem:[#allocation6 + $0x68] sm:$0xff]
    %v283 = vld [vmem:[#allocation6 + $0x70] sm:$0xff]
    %v284 = vld [vmem:[#allocation6 + $0x78] sm:$0xff]
    %v285 = vld [vmem:[%s6] sm:$0x1]
    %v287 = vlaneseq
    %v288 = vshrl.u32 %v287, 7
    %v289 = vsub.s32 0, %v288
    %v290 = vrot.slane %v285, %v289
    %292 = vmatprep.subr.mxu0 0.0
    %293 = vmatpush1.msra.mxu0 %v269
    %294 = vmatprep.subr.mxu0 0.0
    %295 = vmatpush1.msra.mxu0 %v270
    %296 = vmatprep.subr.mxu0 0.0
    %297 = vmatpush1.msra.mxu0 %v271
    %298 = vmatprep.subr.mxu0 0.0
    %299 = vmatpush1.msra.mxu0 %v272
    %300 = vmatprep.subr.mxu0 0.0
    %301 = vmatpush1.msra.mxu0 %v273
    %302 = vmatprep.subr.mxu0 0.0
    %303 = vmatpush1.msra.mxu0 %v274
    %304 = vmatprep.subr.mxu0 0.0
    %305 = vmatpush1.msra.mxu0 %v275
    %306 = vmatprep.subr.mxu0 0.0
    %307 = vmatpush1.msra.mxu0 %v276
    %308 = vmatprep.subr.mxu0 0.0
    %309 = vmatpush1.msra.mxu0 %v277
    %310 = vmatprep.subr.mxu0 0.0
    %311 = vmatpush1.msra.mxu0 %v278
    %312 = vmatprep.subr.mxu0 0.0
    %313 = vmatpush1.msra.mxu0 %v279
    %314 = vmatprep.subr.mxu0 0.0
    %315 = vmatpush1.msra.mxu0 %v280
    %316 = vmatprep.subr.mxu0 0.0
    %317 = vmatpush1.msra.mxu0 %v281
    %318 = vmatprep.subr.mxu0 0.0
    %319 = vmatpush1.msra.mxu0 %v282
    %320 = vmatprep.subr.mxu0 0.0
    %321 = vmatpush1.msra.mxu0 %v283
    %322 = vmatprep.subr.mxu0 0.0
    %323 = vmatpush1.msra.mxu0 %v284
    %324 = vmatprep.subr.mxu0 0.0
    %325 = vmatpush1.msra.mxu0 0.0
    %326 = vmatprep.subr.mxu0 0.0
    %327 = vmatpush1.msra.mxu0 0.0
    %328 = vmatprep.subr.mxu0 0.0
    %329 = vmatpush1.msra.mxu0 0.0
    %330 = vmatprep.subr.mxu0 0.0
    %331 = vmatpush1.msra.mxu0 0.0
    %332 = vmatprep.subr.mxu0 0.0
    %333 = vmatpush1.msra.mxu0 0.0
    %334 = vmatprep.subr.mxu0 0.0
    %335 = vmatpush1.msra.mxu0 0.0
    %336 = vmatprep.subr.mxu0 0.0
    %337 = vmatpush1.msra.mxu0 0.0
    %338 = vmatprep.subr.mxu0 0.0
    %339 = vmatpush1.msra.mxu0 0.0
    %340 = vmatprep.subr.mxu0 0.0
    %341 = vmatpush1.msra.mxu0 0.0
    %342 = vmatprep.subr.mxu0 0.0
    %343 = vmatpush1.msra.mxu0 0.0
    %344 = vmatprep.subr.mxu0 0.0
    %345 = vmatpush1.msra.mxu0 0.0
    %346 = vmatprep.subr.mxu0 0.0
    %347 = vmatpush1.msra.mxu0 0.0
    %348 = vmatprep.subr.mxu0 0.0
    %349 = vmatpush1.msra.mxu0 0.0
    %350 = vmatprep.subr.mxu0 0.0
    %351 = vmatpush1.msra.mxu0 0.0
    %352 = vmatprep.subr.mxu0 0.0
    %353 = vmatpush1.msra.mxu0 0.0
    %354 = vmatprep.subr.mxu0 0.0
    %355 = vmatpush1.msra.mxu0 0.0
    %356 = vmatprep.mubr.f32.mxu0 0.0
    %357 = vmatmul.mubr.f32.gmra.mrb[0].mxu0 %v267
    %v358 = vpop.f32.mrb[0].mxu0
    %v359 = vadd.f32 %v290, %v358
    %v360 = vpop.f32.mrb[0].mxu0
    %361 = vmatprep.mubr.f32.mxu0 0.0
    %362 = vmatmul.mubr.f32.gmra.mrb[0].mxu0 %v268
    %v363 = vpop.f32.mrb[0].mxu0
    %v364 = vadd.f32 %v290, %v363
    %v365 = vpop.f32.mrb[0].mxu0
    %366 = vdwg.mxu0
    %367 = vst [vmem:[%s7] sm:$0xff] %v359
    %368 = vst [vmem:[%s7 + $0x8] sm:$0xff] %v364
    // Predicated region
    $region42: #{_fused_mlp_forward.1} parent=1 // pred_check
      _
    $region43: #{_fused_mlp_forward.1} parent=1 // pred_check_branch
      %370 = sbr.rel (0) target = $region45
    $region44: #{_fused_mlp_forward.1} parent=1 // pred_region
      _
    $region45: #{_fused_mlp_forward.1} parent=1 // pred_fallthru
      _
    // Predicated region
    $region46: #{_fused_mlp_forward.1} parent=1 // pred_check
      _
    $region47: #{_fused_mlp_forward.1} parent=1 // pred_check_branch
      %372 = sbr.rel (0) target = $region49
    $region48: #{_fused_mlp_forward.1} parent=1 // pred_region
      _
    $region49: #{_fused_mlp_forward.1} parent=1 // pred_fallthru
      _
    %373 = vsyncpa [#allocation3], 1
    %374 = vsyncpa [#allocation5], 1

</llo_original>
